<compile_context>
chip_gen: v7x
topology: tpu7x:2x2x1
jax: 0.10.0
libtpu: 0.0.40
codegen_flags: <defaults>
</compile_context>

<pallas_src>
import math

import jax
import jax.numpy as jnp
from jax import lax
from jax.experimental import pallas as pl
from jax.experimental.pallas import tpu as pltpu

_SQRT2 = math.sqrt(2.0)
_LRELU_SLOPE = 0.2


# ------------- fixed-coefficient reference chain (init-time / checks) --------
def upfirdn2d(x, kernel, up=1, down=1, pad=(0, 0)):
    """Matches rosinality's upfirdn2d_native for non-negative pads (NCHW)."""
    if len(pad) == 2:
        pad = (pad[0], pad[1], pad[0], pad[1])
    pad_x0, pad_x1, pad_y0, pad_y1 = pad
    n, c, h, w = x.shape
    if up > 1:
        x = x.reshape(n, c, h, 1, w, 1)
        x = jnp.pad(x, ((0, 0), (0, 0), (0, 0), (0, up - 1), (0, 0), (0, up - 1)))
        x = x.reshape(n, c, h * up, w * up)
    x = jnp.pad(x, ((0, 0), (0, 0), (pad_y0, pad_y1), (pad_x0, pad_x1)))
    wgt = jnp.flip(kernel, (0, 1))[None, None, :, :].astype(x.dtype)
    wgt = jnp.tile(wgt, (c, 1, 1, 1))
    y = lax.conv_general_dilated(
        x, wgt, window_strides=(1, 1), padding="VALID",
        dimension_numbers=("NCHW", "OIHW", "NCHW"),
        feature_group_count=c, precision=lax.Precision.HIGHEST)
    return y[:, :, ::down, ::down]


def get_haar_wavelet():
    a = 1.0 / math.sqrt(2.0)
    l = jnp.array([[a, a]], dtype=jnp.float32)
    h = jnp.array([[-a, a]], dtype=jnp.float32)
    return l.T * l, h.T * l, l.T * h, h.T * h   # ll, lh, hl, hh


def make_blur_kernel(k):
    k = jnp.asarray(k, dtype=jnp.float32)
    k2 = k[None, :] * k[:, None]
    return k2 / jnp.sum(k2)


def reference_wavelet_downsample(x, blur_kernel=(1, 3, 3, 1)):
    """InverseHaarTransform(4) -> Downsample(blur) -> HaarTransform(4)."""
    ll, lh, hl, hh = get_haar_wavelet()
    blur_k = make_blur_kernel(blur_kernel)
    a, b, c, d = jnp.split(x, 4, axis=1)
    a = upfirdn2d(a, ll, up=2, pad=(1, 0, 1, 0))
    b = upfirdn2d(b, -lh, up=2, pad=(1, 0, 1, 0))
    c = upfirdn2d(c, -hl, up=2, pad=(1, 0, 1, 0))
    d = upfirdn2d(d, hh, up=2, pad=(1, 0, 1, 0))
    y = a + b + c + d
    y = upfirdn2d(y, blur_k, down=2, pad=(1, 1))
    o_ll = upfirdn2d(y, ll, down=2)
    o_lh = upfirdn2d(y, lh, down=2)
    o_hl = upfirdn2d(y, hl, down=2)
    o_hh = upfirdn2d(y, hh, down=2)
    return jnp.concatenate((o_ll, o_lh, o_hl, o_hh), axis=1)


def build_composed_wavelet_kernel(blur_kernel=(1, 3, 3, 1)):
    """Collapse IWT -> blur-down -> DWT into one 16->16, 4x4, stride-2, pad-1 conv.

    The chain is linear with constant coefficients; in the input domain it is a
    stride-2 conv whose receptive field per output pixel is x[2s-1 : 2s+3] per
    spatial dim, and its cascaded zero pads are equivalent to a single zero pad
    of 1.  The exact 16x16x4x4 kernel is extracted by pushing unit impulses
    (two spatial parities per axis) through the reference chain once at init.
    """
    cin = 16
    size = 16           # impulse canvas; receptive fields stay interior
    a0 = 6              # even anchor row/col
    bidx = jnp.arange(cin * 4)
    ci = bidx // 4
    pa = (bidx // 2) % 2
    pb = bidx % 2
    imp = jnp.zeros((cin * 4, cin, size, size), dtype=jnp.float32)
    imp = imp.at[bidx, ci, a0 + pa, a0 + pb].set(1.0)
    resp = reference_wavelet_downsample(imp, blur_kernel)        # (64, 16, 8, 8)
    resp = resp.reshape(cin, 2, 2, cin, size // 2, size // 2)    # [ci,pa,pb,co,s,t]

    kern = jnp.zeros((cin, cin, 4, 4), dtype=jnp.float32)        # OIHW
    for di in range(4):
        pa_i = (di + 1) % 2
        s = (a0 + pa_i + 1 - di) // 2
        for dj in range(4):
            pb_j = (dj + 1) % 2
            t = (a0 + pb_j + 1 - dj) // 2
            # impulse at (ci, a, b): resp[co, s, t] = kern[co, ci, a+1-2s, b+1-2t]
            kern = kern.at[:, :, di, dj].set(resp[:, pa_i, pb_j, :, s, t].T)
    return kern


def wavelet_downsample_composed(x, kern, out_dtype=None):
    """Single strided conv replacing the 9-conv upfirdn2d chain (exact)."""
    # TODO(synk): fold this fixed 4x4/stride-2 conv into the Pallas kernel below
    # as a K=256 im2col matmul (saves one HBM re-read of x_t and fills the MXU).
    y = lax.conv_general_dilated(
        x, kern.astype(x.dtype), window_strides=(2, 2),
        padding=((1, 1), (1, 1)),
        dimension_numbers=("NCHW", "OIHW", "NCHW"),
        precision=lax.Precision.HIGHEST)
    if out_dtype is not None:
        # Producer-side cast: under jit this convert fuses into the conv
        # epilogue (no standalone HBM read/write pass).
        y = y.astype(out_dtype)
    return y


# --------------------------- Pallas hot-path kernel --------------------------
def _conv1x1_fused_lrelu_kernel(w_ref, b_ref, x_ref, o_ref):
    # w_ref: (Cout, Cin)  b_ref: (Cout, 1)  x_ref: (Cin, TM)  o_ref: (Cout, TM)
    # M (= H*W) is lane-dense; Cin/Cout sit on sublanes -> unmasked full-lane vst.
    # sqrt(2) gain is pre-folded into w/b on the host (commutes with leaky_relu).
    y = jnp.dot(w_ref[...], x_ref[...], preferred_element_type=jnp.float32)
    y = y + b_ref[...]                              # FusedLeakyReLU bias (f32)
    y = jnp.where(y >= 0.0, y, _LRELU_SLOPE * y)    # leaky_relu(0.2)
    o_ref[...] = y.astype(o_ref.dtype)


def _vmem_capacity_bytes():
    try:
        info = pltpu.get_tpu_info()
        cap = getattr(info, "vmem_capacity_bytes", None)
        if cap:
            return int(cap)
    except Exception:
        pass
    return 64 << 20   # conservative default (v7x per-TensorCore VMEM)


def _select_tile_m(hw, n, cin, cout, in_bytes, out_bytes, tm_max):
    """Lane-aligned M tile from a per-generation VMEM budget (double-buffered)."""
    vmem_cap = _vmem_capacity_bytes()
    per_m = 2 * (cin * in_bytes + cout * out_bytes)     # 2 = double buffering
    budget = vmem_cap // 4                              # headroom under scoped limit
    cap_from_vmem = max(128, (budget // per_m) // 128 * 128)
    tile_m = min(int(tm_max), int(cap_from_vmem))
    if hw <= tile_m:
        tile_m = hw                                     # one full-extent tile per image
    grid_m = pl.cdiv(hw, tile_m)
    # Megacore (v7x): guarantee >= 2 grid blocks so both TensorCores get work.
    if n * grid_m < 2 and hw >= 256:
        tile_m = (((hw + 1) // 2) + 127) // 128 * 128
        grid_m = pl.cdiv(hw, tile_m)
    return tile_m, grid_m, vmem_cap


def conv1x1_fused_lrelu(x_nchw, weight, bias, *, tm_max=8192, out_dtype=None):
    """EqualConv2d(k=1, bias=False) + FusedLeakyReLU as a lane-dense Pallas matmul.

    NCHW is consumed directly as a free (N*Cin, H*W) view (no transposes/pads);
    grid = (N, ceil(HW/TM)), both axes "parallel" (v7x megacore sharding).
    """
    n, cin, h, w = x_nchw.shape
    cout = weight.shape[0]
    hw = h * w
    out_dtype = jnp.dtype(out_dtype) if out_dtype is not None else x_nchw.dtype

    # EqualConv2d weight scale and the FusedLeakyReLU sqrt(2) gain, folded into
    # W and b (exact: sqrt(2) > 0 commutes with the leaky-relu slope).
    scale = (1.0 / math.sqrt(cin * 1 * 1)) * _SQRT2
    w_mat = weight.reshape(cout, cin).astype(jnp.float32) * scale     # (Cout, Cin)
    b_mat = (bias.astype(jnp.float32) * _SQRT2).reshape(cout, 1)      # (Cout, 1), f32
    if x_nchw.dtype == jnp.bfloat16:
        w_mat = w_mat.astype(jnp.bfloat16)          # match producer-emitted bf16 x

    if hw < 128 or cin % 8 != 0 or cout % 8 != 0:
        # TODO(synk): pack N onto the lane axis instead of this XLA fallback; a
        # <128-lane output block would force masked vst.msk partial stores and
        # the kernel would be pure launch/step overhead anyway.
        y = jnp.einsum("oc,nchw->nohw", w_mat.astype(jnp.float32),
                       x_nchw.astype(jnp.float32),
                       precision=lax.Precision.HIGHEST)
        y = y + b_mat.reshape(1, cout, 1, 1)
        y = jnp.where(y >= 0.0, y, _LRELU_SLOPE * y)
        return y.astype(out_dtype)

    x_mat = x_nchw.reshape(n * cin, hw)             # free row-major view of NCHW
    in_bytes = x_mat.dtype.itemsize
    out_bytes = out_dtype.itemsize

    tile_m, grid_m, vmem_cap = _select_tile_m(
        hw, n, cin, cout, in_bytes, out_bytes, tm_max)

    # Scoped-VMEM request: double-buffered x + out blocks plus resident w/b.
    block_bytes = (2 * tile_m * (cin * in_bytes + cout * out_bytes)
                   + cout * (cin * w_mat.dtype.itemsize + 4))
    vmem_limit = int(min(vmem_cap, max(32 << 20, 2 * block_bytes)))

    flops = 2 * n * hw * cin * cout
    bytes_accessed = (x_mat.size * in_bytes
                      + w_mat.size * w_mat.dtype.itemsize
                      + b_mat.size * 4
                      + n * cout * hw * out_bytes)

    out = pl.pallas_call(
        _conv1x1_fused_lrelu_kernel,
        out_shape=jax.ShapeDtypeStruct((n * cout, hw), out_dtype),
        grid_spec=pltpu.PrefetchScalarGridSpec(
            num_scalar_prefetch=0,
            grid=(n, grid_m),
            in_specs=[
                pl.BlockSpec((cout, cin), lambda b, m: (0, 0)),
                pl.BlockSpec((cout, 1), lambda b, m: (0, 0)),
                pl.BlockSpec((cin, tile_m), lambda b, m: (b, m)),
            ],
            out_specs=pl.BlockSpec((cout, tile_m), lambda b, m: (b, m)),
        ),
        compiler_params=pltpu.CompilerParams(
            dimension_semantics=("parallel", "parallel"),
            vmem_limit_bytes=vmem_limit),
        cost_estimate=pl.CostEstimate(
            flops=int(flops), transcendentals=0,
            bytes_accessed=int(bytes_accessed)),
    )(w_mat, b_mat, x_mat)

    return out.reshape(n, cout, h, w)               # free reshape back to NCHW


# --------------------------------- FromRGB -----------------------------------
class FromRGB:
    def __init__(self, out_channel, downsample=True, blur_kernel=(1, 3, 3, 1),
                 key=None, use_bf16_matmul=False, out_dtype=None):
        self.downsample = downsample
        self.use_bf16_matmul = use_bf16_matmul   # bf16 emitted by the producer conv
        self.out_dtype = out_dtype               # e.g. jnp.bfloat16 to halve the store
        if downsample:
            # IWT -> blur-down -> DWT precomposed exactly into one strided conv.
            self.wavelet_kern = build_composed_wavelet_kernel(blur_kernel)
        in_channel = 4 * 4
        key = key if key is not None else jax.random.PRNGKey(0)
        # EqualConv2d: weight ~ N(0,1), shape (Cout, Cin, 1, 1); conv bias=False
        self.weight = jax.random.normal(
            key, (out_channel, in_channel, 1, 1), dtype=jnp.float32)
        # FusedLeakyReLU: bias init to zeros
        self.bias = jnp.zeros((out_channel,), dtype=jnp.float32)

    def __call__(self, x, skip=None):
        if self.downsample:
            # NOTE: with use_bf16_matmul the returned x_t is bf16 (producer-cast).
            x = wavelet_downsample_composed(
                x, self.wavelet_kern,
                out_dtype=jnp.bfloat16 if self.use_bf16_matmul else None)
        elif self.use_bf16_matmul and x.dtype != jnp.bfloat16:
            # Standalone convert: only pays off if the caller's producer fuses it.
            x = x.astype(jnp.bfloat16)
        out = conv1x1_fused_lrelu(x, self.weight, self.bias,
                                  out_dtype=self.out_dtype)
        if skip is not None:
            out = out + skip
        return x, out


if __name__ == "__main__":
    key = jax.random.PRNGKey(0)
    k_x, k_w = jax.random.split(key)

    # input: (N=2, C=16 (=4*4 wavelet channels), H=32, W=32), NCHW.
    # 32x32 -> 16x16 after the wavelet downsample, so H*W = 256 >= 128 lanes and
    # the Pallas path (not the tiny-hw XLA fallback) is exercised.
    x = jax.random.normal(k_x, (2, 16, 32, 32), dtype=jnp.float32)

    model = FromRGB(out_channel=32, downsample=True, key=k_w)
    x_t, out = jax.block_until_ready(jax.jit(lambda inp: model(inp))(x))

    assert x_t.shape == (2, 16, 16, 16), x_t.shape
    assert out.shape == (2, 32, 16, 16), out.shape
    assert bool(jnp.all(jnp.isfinite(x_t))) and bool(jnp.all(jnp.isfinite(out)))

    # correctness: composed wavelet conv vs the unfused 9-conv reference chain
    x_t_ref = reference_wavelet_downsample(x)
    assert jnp.allclose(x_t, x_t_ref, rtol=1e-3, atol=1e-3), "wavelet mismatch"

    # correctness: Pallas 1x1-conv + FusedLeakyReLU vs plain-JAX reference
    w_mat = model.weight.reshape(32, 16) * (1.0 / math.sqrt(16))
    pre = jnp.einsum("oc,nchw->nohw", w_mat, x_t_ref,
                     precision=lax.Precision.HIGHEST)
    pre = pre + model.bias[None, :, None, None]
    out_ref = jnp.where(pre >= 0.0, pre, 0.2 * pre) * _SQRT2
    assert jnp.allclose(out, out_ref, rtol=5e-2, atol=5e-2), "conv1x1 mismatch"

    # no-downsample head (direct 1x1) also exercises the Pallas kernel
    model_nd = FromRGB(out_channel=32, downsample=False, key=k_w)
    x_nd = jax.random.normal(k_x, (2, 16, 16, 16), dtype=jnp.float32)
    x_same, out_nd = jax.block_until_ready(jax.jit(lambda inp: model_nd(inp))(x_nd))
    pre_nd = jnp.einsum("oc,nchw->nohw", w_mat, x_nd,
                        precision=lax.Precision.HIGHEST)
    out_nd_ref = jnp.where(pre_nd >= 0.0, pre_nd, 0.2 * pre_nd) * _SQRT2
    assert out_nd.shape == (2, 32, 16, 16)
    assert jnp.allclose(out_nd, out_nd_ref, rtol=5e-2, atol=5e-2), "no-downsample mismatch"

    # bf16 fast path: producer-emitted bf16 inputs + bf16 output store (loose check)
    model_bf = FromRGB(out_channel=32, downsample=True, key=k_w,
                       use_bf16_matmul=True, out_dtype=jnp.bfloat16)
    x_t_bf, out_bf = jax.block_until_ready(jax.jit(lambda inp: model_bf(inp))(x))
    assert x_t_bf.dtype == jnp.bfloat16 and out_bf.dtype == jnp.bfloat16
    assert jnp.allclose(out_bf.astype(jnp.float32), out_ref,
                        rtol=1e-1, atol=1e-1), "bf16 path mismatch"

    print("KERNEL_OK")
</pallas_src>

<mosaic_0001>
module attributes {stable_mosaic.version = 11 : i64} {
  func.func @_conv1x1_fused_lrelu_kernel(%arg0: i32, %arg1: i32, %arg2: memref<32x16xf32, #tpu.memory_space<vmem>>, %arg3: memref<32x1xf32, #tpu.memory_space<vmem>>, %arg4: memref<16x256xf32, #tpu.memory_space<vmem>>, %arg5: memref<32x256xf32, #tpu.memory_space<vmem>>) attributes {dimension_semantics = [#tpu.dimension_semantics<parallel>, #tpu.dimension_semantics<parallel>], iteration_bounds = array<i64: 2, 1>, scalar_prefetch = 0 : i64, scratch_operands = 0 : i64, tpu.core_type = #tpu.core_type<tc>, window_params = [{pipeline_mode = #tpu.pipeline_mode<synchronous>, transform_indices = @transform_0, window_bounds = array<i64: 32, 16>}, {pipeline_mode = #tpu.pipeline_mode<synchronous>, transform_indices = @transform_1, window_bounds = array<i64: 32, 1>}, {transform_indices = @transform_2, window_bounds = array<i64: 16, 256>}, {transform_indices = @transform_3, window_bounds = array<i64: 32, 256>}]} {
    %c0 = arith.constant 0 : index
    %c0_0 = arith.constant 0 : index
    %0 = vector.load %arg2[%c0, %c0_0] : memref<32x16xf32, #tpu.memory_space<vmem>>, vector<32x16xf32>
    %c0_1 = arith.constant 0 : index
    %c0_2 = arith.constant 0 : index
    %1 = vector.load %arg4[%c0_1, %c0_2] : memref<16x256xf32, #tpu.memory_space<vmem>>, vector<16x256xf32>
    %cst = arith.constant dense<0.000000e+00> : vector<32x256xf32>
    %2 = tpu.matmul %0, %1, %cst {dimension_numbers = #tpu.dot_dimension_numbers<[1], [0], [0], [1], [0, 0, 1, 1], [], []>} : vector<32x16xf32>, vector<16x256xf32>, vector<32x256xf32> -> vector<32x256xf32>
    %c0_3 = arith.constant 0 : index
    %c0_4 = arith.constant 0 : index
    %3 = vector.load %arg3[%c0_3, %c0_4] : memref<32x1xf32, #tpu.memory_space<vmem>>, vector<32x1xf32>
    %4 = vector.broadcast %3 : vector<32x1xf32> to vector<32x256xf32>
    %5 = arith.addf %2, %4 : vector<32x256xf32>
    %cst_5 = arith.constant 0.000000e+00 : f32
    %6 = vector.broadcast %cst_5 : f32 to vector<32x256xf32>
    %7 = arith.cmpf oge, %5, %6 : vector<32x256xf32>
    %cst_6 = arith.constant 2.000000e-01 : f32
    %8 = vector.broadcast %cst_6 : f32 to vector<32x256xf32>
    %9 = arith.mulf %8, %5 : vector<32x256xf32>
    %10 = arith.select %7, %5, %9 : vector<32x256xi1>, vector<32x256xf32>
    %c0_7 = arith.constant 0 : index
    %c0_8 = arith.constant 0 : index
    %11 = vector.load %arg5[%c0_7, %c0_8] : memref<32x256xf32, #tpu.memory_space<vmem>>, vector<32x256xf32>
    tpu.vector_store %arg5[%c0_7, %c0_8], %10 {strides = array<i32>} : memref<32x256xf32, #tpu.memory_space<vmem>>, vector<32x256xf32>,
    return
  }
  func.func @transform_0(%arg0: i32, %arg1: i32) -> (i32, i32) {
    %c0_i32 = arith.constant 0 : i32
    %c0_i32_0 = arith.constant 0 : i32
    %c0_i32_1 = arith.constant 0 : i32
    return %c0_i32, %c0_i32_0 : i32, i32
  }
  func.func @transform_1(%arg0: i32, %arg1: i32) -> (i32, i32) {
    %c0_i32 = arith.constant 0 : i32
    %c0_i32_0 = arith.constant 0 : i32
    %c0_i32_1 = arith.constant 0 : i32
    return %c0_i32, %c0_i32_0 : i32, i32
  }
  func.func @transform_2(%arg0: i32, %arg1: i32) -> (i32, i32) {
    %c0_i32 = arith.constant 0 : i32
    return %arg0, %arg1 : i32, i32
  }
  func.func @transform_3(%arg0: i32, %arg1: i32) -> (i32, i32) {
    %c0_i32 = arith.constant 0 : i32
    return %arg0, %arg1 : i32, i32
  }
}

</mosaic_0001>

<llo_original>
// kernel: _lambda_.1
$region0: #{_lambda_.1}
  #allocation0 [shape = 'u32[]', space=smem, size = 0x4, offset = 0x4, fixed_abs, tag = 'smem constant byte address 0x4 - core index']
  #allocation1 [shape = 'u32[144,128]{1,0:T(1,128)}', space=vmem, size = 0x12000, scoped, tag = 'internal scratch']
  %s0 = inlined_call_operand.vmem [shape: f32[32,16], index: 0, kind: input, shape index: {}]
  %s1 = inlined_call_operand.vmem [shape: f32[32,1], index: 1, kind: input, shape index: {}]
  %s2 = inlined_call_operand.vmem [shape: f32[32,256], index: 2, kind: input, shape index: {}]
  %s3 = inlined_call_operand.vmem [shape: f32[64,256], index: 3, kind: output, shape index: {}]
  %s4 = sld [smem:[#allocation0]]
  $region45: #{_lambda_.1} parent=0
    _
  %s6 = ssub.s32 1, %s4
  %s7 = scalar_select 0, %s6, %s4
  loop: start=0, step=1, limit=4
  $region2: #{_lambda_.1} parent=0 // loop_pre_header
    _
  $region3: #{_lambda_.1} parent=0 // loop_header
    %s9 = sphi 0, %s13
    %p10 = scmp.ge.s32.totalorder %s9, 4
    %s16 = sphi 0, %s28
    %s17 = sphi 0, %s24
    %s18 = sphi 0, %s16
    %s19 = sphi 0, %s17
    %s20 = sphi 0, %s18
    %s21 = sphi 0, %s19
    %s29 = sphi 0, %s29
    %s31 = sphi 0, %s29
    %s32 = sphi 0, %s31
    %s46 = sphi 0, %s32
    %s50 = sphi 0, %s50
    %s52 = sphi 0, %s50
    %s53 = sphi 0, %s52
    %s67 = sphi 0, %s53
    %s75 = sphi 0, %s77
    %s78 = sphi 0, %s75
    %s79 = sphi 0, %s78
    %s95 = sphi 0, %s79
    %s103 = sphi 0, %s105
    %s106 = sphi 0, %s103
    %s107 = sphi 0, %s106
    %s123 = sphi 0, %s107
  $region4: #{_lambda_.1} parent=0 // loop_header_branch
    %12 = sbr.rel (%p10) target = $region8
  $region5: #{_lambda_.1} parent=0 // loop_body
    %s14 = ssub.s32 %s9, 1
    %s15 = ssub.s32 %s9, 2
    %s22 = sadd.s32 1, %s17
    %p23 = scmp.ge.s32.totalorder %s22, 1
    %s24 = scalar_select %p23, 0, %s22
    %s25 = sadd.s32 1, %s16
    %s26 = scalar_select %p23, %s25, %s16
    %p27 = scmp.ge.s32.totalorder %s26, 2
    %s28 = scalar_select %p27, 0, %s26
    %s30 = sadd.s32 %s29, 1
    %p33 = scmp.eq.s32.totalorder %s9, 1
    %p34 = scmp.ne.s32.totalorder %s29, %s31
    %p35 = scmp.eq.s32.totalorder %s9, 0
    %p36 = por %p34, %p35
    %p37 = scmp.ne.s32.totalorder %s29, %s31
    %p38 = scmp.eq.s32.totalorder %s14, 1
    %p39 = por %p37, %p38
    %p40 = scmp.ne.s32.totalorder %s31, %s32
    %p41 = scmp.eq.s32.totalorder %s14, 0
    %p42 = por %p40, %p41
    %p43 = scmp.ne.s32.totalorder %s31, %s32
    %p44 = scmp.eq.s32.totalorder %s15, 1
    %p45 = por %p43, %p44
    %p47 = scmp.ne.s32.totalorder %s32, %s46
    %p48 = scmp.eq.s32.totalorder %s15, 0
    %p49 = por %p47, %p48
    %s51 = sadd.s32 %s50, 1
    %p54 = scmp.eq.s32.totalorder %s9, 1
    %p55 = scmp.ne.s32.totalorder %s50, %s52
    %p56 = scmp.eq.s32.totalorder %s9, 0
    %p57 = por %p55, %p56
    %p58 = scmp.ne.s32.totalorder %s50, %s52
    %p59 = scmp.eq.s32.totalorder %s14, 1
    %p60 = por %p58, %p59
    %p61 = scmp.ne.s32.totalorder %s52, %s53
    %p62 = scmp.eq.s32.totalorder %s14, 0
    %p63 = por %p61, %p62
    %p64 = scmp.ne.s32.totalorder %s52, %s53
    %p65 = scmp.eq.s32.totalorder %s15, 1
    %p66 = por %p64, %p65
    %p68 = scmp.ne.s32.totalorder %s53, %s67
    %p69 = scmp.eq.s32.totalorder %s15, 0
    %p70 = por %p68, %p69
    %s71 = ssub.s32 %s16, %s28
    %s72 = ssub.s32 %s17, %s24
    %s73 = sor.u32 %s71, %s72
    %p74 = scmp.eq.s32.totalorder %s73, 0
    %s76 = sadd.s32 %s75, 1
    %s77 = scalar_select %p74, %s75, %s76
    %p80 = pneg %p74
    %p81 = scmp.eq.s32.totalorder %s9, 1
    %p82 = por %p80, %p81
    %p83 = scmp.ne.s32.totalorder %s75, %s78
    %p84 = scmp.eq.s32.totalorder %s9, 0
    %p85 = por %p83, %p84
    %p86 = scmp.ne.s32.totalorder %s75, %s78
    %p87 = scmp.eq.s32.totalorder %s14, 1
    %p88 = por %p86, %p87
    %p89 = scmp.ne.s32.totalorder %s78, %s79
    %p90 = scmp.eq.s32.totalorder %s14, 0
    %p91 = por %p89, %p90
    %p92 = scmp.ne.s32.totalorder %s78, %s79
    %p93 = scmp.eq.s32.totalorder %s15, 1
    %p94 = por %p92, %p93
    %p96 = scmp.ne.s32.totalorder %s79, %s95
    %p97 = scmp.eq.s32.totalorder %s15, 0
    %p98 = por %p96, %p97
    %s99 = ssub.s32 %s16, %s28
    %s100 = ssub.s32 %s17, %s24
    %s101 = sor.u32 %s99, %s100
    %p102 = scmp.eq.s32.totalorder %s101, 0
    %s104 = sadd.s32 %s103, 1
    %s105 = scalar_select %p102, %s103, %s104
    %p108 = pneg %p102
    %p109 = scmp.eq.s32.totalorder %s9, 1
    %p110 = por %p108, %p109
    %p111 = scmp.ne.s32.totalorder %s103, %s106
    %p112 = scmp.eq.s32.totalorder %s9, 0
    %p113 = por %p111, %p112
    %p114 = scmp.ne.s32.totalorder %s103, %s106
    %p115 = scmp.eq.s32.totalorder %s14, 1
    %p116 = por %p114, %p115
    %p117 = scmp.ne.s32.totalorder %s106, %s107
    %p118 = scmp.eq.s32.totalorder %s14, 0
    %p119 = por %p117, %p118
    %p120 = scmp.ne.s32.totalorder %s106, %s107
    %p121 = scmp.eq.s32.totalorder %s15, 1
    %p122 = por %p120, %p121
    %p124 = scmp.ne.s32.totalorder %s107, %s123
    %p125 = scmp.eq.s32.totalorder %s15, 0
    %p126 = por %p124, %p125
    %p127 = scmp.le.s32.totalorder 1, %s9
    %p128 = scmp.lt.s32.totalorder %s9, 3
    %p129 = pnand %p127, %p128
    %p130 = pneg %p129
    // Predicated region
    $region9: #{_lambda_.1} parent=5 // pred_check
      _
    $region10: #{_lambda_.1} parent=5 // pred_check_branch
      %132 = sbr.rel (%p129) target = $region12
    $region11: #{_lambda_.1} parent=5 // pred_region
      %s133 = ssub.s32 %s9, 1
      // Predicated region
      $region13: #{_lambda_.1} parent=11 // pred_check
        %p134 = pneg %p42
      $region14: #{_lambda_.1} parent=11 // pred_check_branch
        %136 = sbr.rel (%p134) target = $region16
      $region15: #{_lambda_.1} parent=11 // pred_region
        _
      $region16: #{_lambda_.1} parent=11 // pred_fallthru
        _
      // Predicated region
      $region17: #{_lambda_.1} parent=11 // pred_check
        %p137 = pneg %p63
      $region18: #{_lambda_.1} parent=11 // pred_check_branch
        %139 = sbr.rel (%p137) target = $region20
      $region19: #{_lambda_.1} parent=11 // pred_region
        _
      $region20: #{_lambda_.1} parent=11 // pred_fallthru
        _
    $region12: #{_lambda_.1} parent=5 // pred_fallthru
      _
    %p140 = scmp.lt.s32.totalorder %s9, 2
    // Predicated region
    $region21: #{_lambda_.1} parent=5 // pred_check
      %p141 = pneg %p140
    $region22: #{_lambda_.1} parent=5 // pred_check_branch
      %143 = sbr.rel (%p141) target = $region24
    $region23: #{_lambda_.1} parent=5 // pred_region
      // Predicated region
      $region25: #{_lambda_.1} parent=23 // pred_check
        %p144 = pneg %p85
      $region26: #{_lambda_.1} parent=23 // pred_check_branch
        %146 = sbr.rel (%p144) target = $region28
      $region27: #{_lambda_.1} parent=23 // pred_region
        %s147 = smul.u32 2, %s16
        %s148 = smul.u32 2, %s17
        %p149 = scmp.lt.s32.totalorder %s147, 3
        %s150 = scalar_select %p149, %s147, 3
        %p151 = scmp.lt.s32.totalorder %s148, 1
        %s152 = scalar_select %p151, %s148, 1
        %s153 = smul.addr %s150, 2
        %s154 = sadd.s32 %s152, %s153
        %s155 = smul.addr %s154, 8
        %s156 = scalar_lea.vmem %s2, %s155
        %s157 = smul.u32 2, %s16
        %s158 = smul.u32 2, %s17
      $region28: #{_lambda_.1} parent=23 // pred_fallthru
        _
    $region24: #{_lambda_.1} parent=5 // pred_fallthru
      _
    %p159 = scmp.le.s32.totalorder 1, %s9
    %p160 = scmp.lt.s32.totalorder %s9, 3
    %p161 = pnand %p159, %p160
    %p162 = pneg %p161
    // Predicated region
    $region29: #{_lambda_.1} parent=5 // pred_check
      _
    $region30: #{_lambda_.1} parent=5 // pred_check_branch
      %164 = sbr.rel (%p161) target = $region32
    $region31: #{_lambda_.1} parent=5 // pred_region
      %s165 = ssub.s32 %s9, 1
      %p166 = pneg %p42
      %p167 = pneg %p39
      %p168 = pneg %p63
      %p169 = pneg %p60
      %s170 = smul.u32 2, %s18
      %s171 = smul.u32 2, %s19
      %p172 = scmp.lt.s32.totalorder %s170, 3
      %s173 = scalar_select %p172, %s170, 3
      %p174 = scmp.lt.s32.totalorder %s171, 1
      %s175 = scalar_select %p174, %s171, 1
      %s176 = smul.addr %s173, 2
      %s177 = sadd.s32 %s175, %s176
      %s178 = smul.addr %s177, 8
      %s179 = scalar_lea.vmem %s2, %s178
      %p180 = pneg %p91
      %p181 = pneg %p88
      %p182 = pneg %p119
      %p183 = pneg %p116
      %s184 = smul.u32 4, %s18
      %s185 = smul.u32 2, %s19
      %p186 = scmp.lt.s32.totalorder %s184, 7
      %s187 = scalar_select %p186, %s184, 7
      %p188 = scmp.lt.s32.totalorder %s185, 1
      %s189 = scalar_select %p188, %s185, 1
      %s190 = smul.addr %s187, 2
      %s191 = sadd.s32 %s189, %s190
      %s192 = smul.addr %s191, 8
      %s193 = scalar_lea.vmem %s3, %s192
      %s194 = smul.u32 2, %s18
      %s195 = smul.u32 2, %s19
      %p196 = scmp.lt.s32.totalorder %s194, 3
      %s197 = scalar_select %p196, %s194, 3
      %p198 = scmp.lt.s32.totalorder %s195, 1
      %s199 = scalar_select %p198, %s195, 1
      %s200 = smul.addr %s197, 2
      %s201 = sadd.s32 %s199, %s200
      %s202 = smul.addr %s201, 8
      %s203 = scalar_lea.vmem %s2, %s202
      %s204 = smul.u32 2, %s18
      %s205 = smul.u32 2, %s19
      %s206 = smul.u32 4, %s18
      %s207 = smul.u32 2, %s19
      %p208 = scmp.lt.s32.totalorder %s206, 7
      %s209 = scalar_select %p208, %s206, 7
      %p210 = scmp.lt.s32.totalorder %s207, 1
      %s211 = scalar_select %p210, %s207, 1
      %s212 = smul.addr %s209, 2
      %s213 = sadd.s32 %s211, %s212
      %s214 = smul.addr %s213, 8
      %s215 = scalar_lea.vmem %s3, %s214
      %s216 = smul.u32 4, %s18
      %s217 = smul.u32 2, %s19
      %v218 = vld [vmem:[%s0] sm:$0xff]
      %v219 = vld [vmem:[%s0 + $0x8] sm:$0xff]
      %v220 = vld [vmem:[%s0 + $0x10] sm:$0xff]
      %v221 = vld [vmem:[%s0 + $0x18] sm:$0xff]
      %v222 = vld [vmem:[%s203] sm:$0xff]
      %v223 = vld [vmem:[%s203 + $0x8] sm:$0xff]
      %v224 = vld [vmem:[%s203 + $0x10] sm:$0xff]
      %v225 = vld [vmem:[%s203 + $0x18] sm:$0xff]
      %v226 = vld [vmem:[%s1] sm:$0xff]
      %v227 = vld [vmem:[%s1 + $0x8] sm:$0xff]
      %v228 = vld [vmem:[%s1 + $0x10] sm:$0xff]
      %v229 = vld [vmem:[%s1 + $0x18] sm:$0xff]
      %231 = vset.pattern.permute.xlu0 0
      %232 = vperm.xlu0 %231, %v226
      %v233 = vpop.permute.xlu0 %232
      %236 = vset.pattern.permute.xlu0 0
      %237 = vperm.xlu0 %236, %v227
      %v238 = vpop.permute.xlu0 %237
      %241 = vset.pattern.permute.xlu0 0
      %242 = vperm.xlu0 %241, %v228
      %v243 = vpop.permute.xlu0 %242
      %246 = vset.pattern.permute.xlu0 0
      %247 = vperm.xlu0 %246, %v229
      %v248 = vpop.permute.xlu0 %247
      %vm250 = vcmask 130048
      %v252 = vsel %vm250, %v218, 0
      %v255 = vsel %vm250, %v219, 0
      %v258 = vsel %vm250, %v220, 0
      %v261 = vsel %vm250, %v221, 0
      %263 = vmatprep.subr.mxu0 %v223
      %264 = vmatpush1.msra.mxu0 %v222
      %265 = vmatprep.subr.mxu0 %v225
      %266 = vmatpush1.msra.mxu0 %v224
      %267 = vmatprep.subr.mxu0 0.0
      %268 = vmatpush1.msra.mxu0 0.0
      %269 = vmatprep.subr.mxu0 0.0
      %270 = vmatpush1.msra.mxu0 0.0
      %271 = vmatprep.subr.mxu0 0.0
      %272 = vmatpush1.msra.mxu0 0.0
      %273 = vmatprep.subr.mxu0 0.0
      %274 = vmatpush1.msra.mxu0 0.0
      %275 = vmatprep.subr.mxu0 0.0
      %276 = vmatpush1.msra.mxu0 0.0
      %277 = vmatprep.subr.mxu0 0.0
      %278 = vmatpush1.msra.mxu0 0.0
      %279 = vmatprep.subr.mxu0 0.0
      %280 = vmatpush1.msra.mxu0 0.0
      %281 = vmatprep.subr.mxu0 0.0
      %282 = vmatpush1.msra.mxu0 0.0
      %283 = vmatprep.subr.mxu0 0.0
      %284 = vmatpush1.msra.mxu0 0.0
      %285 = vmatprep.subr.mxu0 0.0
      %286 = vmatpush1.msra.mxu0 0.0
      %287 = vmatprep.subr.mxu0 0.0
      %288 = vmatpush1.msra.mxu0 0.0
      %289 = vmatprep.subr.mxu0 0.0
      %290 = vmatpush1.msra.mxu0 0.0
      %291 = vmatprep.subr.mxu0 0.0
      %292 = vmatpush1.msra.mxu0 0.0
      %293 = vmatprep.subr.mxu0 0.0
      %294 = vmatpush1.msra.mxu0 0.0
      %295 = vmatprep.subr.mxu0 0.0
      %296 = vmatpush1.msra.mxu0 0.0
      %297 = vmatprep.subr.mxu0 0.0
      %298 = vmatpush1.msra.mxu0 0.0
      %299 = vmatprep.subr.mxu0 0.0
      %300 = vmatpush1.msra.mxu0 0.0
      %301 = vmatprep.subr.mxu0 0.0
      %302 = vmatpush1.msra.mxu0 0.0
      %303 = vmatprep.subr.mxu0 0.0
      %304 = vmatpush1.msra.mxu0 0.0
      %305 = vmatprep.subr.mxu0 0.0
      %306 = vmatpush1.msra.mxu0 0.0
      %307 = vmatprep.subr.mxu0 0.0
      %308 = vmatpush1.msra.mxu0 0.0
      %309 = vmatprep.subr.mxu0 0.0
      %310 = vmatpush1.msra.mxu0 0.0
      %311 = vmatprep.subr.mxu0 0.0
      %312 = vmatpush1.msra.mxu0 0.0
      %313 = vmatprep.subr.mxu0 0.0
      %314 = vmatpush1.msra.mxu0 0.0
      %315 = vmatprep.subr.mxu0 0.0
      %316 = vmatpush1.msra.mxu0 0.0
      %317 = vmatprep.subr.mxu0 0.0
      %318 = vmatpush1.msra.mxu0 0.0
      %319 = vmatprep.subr.mxu0 0.0
      %320 = vmatpush1.msra.mxu0 0.0
      %321 = vmatprep.subr.mxu0 0.0
      %322 = vmatpush1.msra.mxu0 0.0
      %323 = vmatprep.subr.mxu0 0.0
      %324 = vmatpush1.msra.mxu0 0.0
      %325 = vmatprep.subr.mxu0 0.0
      %326 = vmatpush1.msra.mxu0 0.0
      %327 = vmatprep.mubr.f32.mxu0 0.0
      %328 = vmatmul.mubr.f32.gmra.mrb[0].mxu0 %v252
      %v329 = vpop.f32.mrb[0].mxu0
      %v330 = vadd.f32 %v233, %v329
      %v331 = vpop.f32.mrb[0].mxu0
      %v332 = vadd.f32 %v233, %v331
      %333 = vmatprep.mubr.f32.mxu0 0.0
      %334 = vmatmul.mubr.f32.gmra.mrb[0].mxu0 %v255
      %v335 = vpop.f32.mrb[0].mxu0
      %v336 = vadd.f32 %v238, %v335
      %v337 = vpop.f32.mrb[0].mxu0
      %v338 = vadd.f32 %v238, %v337
      %339 = vmatprep.mubr.f32.mxu0 0.0
      %340 = vmatmul.mubr.f32.gmra.mrb[0].mxu0 %v258
      %v341 = vpop.f32.mrb[0].mxu0
      %v342 = vadd.f32 %v243, %v341
      %v343 = vpop.f32.mrb[0].mxu0
      %v344 = vadd.f32 %v243, %v343
      %345 = vmatprep.mubr.f32.mxu0 0.0
      %346 = vmatmul.mubr.f32.gmra.mrb[0].mxu0 %v261
      %v347 = vpop.f32.mrb[0].mxu0
      %v348 = vadd.f32 %v248, %v347
      %v349 = vpop.f32.mrb[0].mxu0
      %v350 = vadd.f32 %v248, %v349
      %351 = vdwg.mxu0
      %vm352 = vcmp.ge.f32.partialorder %v330, 0.0
      %vm353 = vcmp.ge.f32.partialorder %v332, 0.0
      %vm354 = vcmp.ge.f32.partialorder %v336, 0.0
      %vm355 = vcmp.ge.f32.partialorder %v338, 0.0
      %vm356 = vcmp.ge.f32.partialorder %v342, 0.0
      %vm357 = vcmp.ge.f32.partialorder %v344, 0.0
      %vm358 = vcmp.ge.f32.partialorder %v348, 0.0
      %vm359 = vcmp.ge.f32.partialorder %v350, 0.0
      %v360 = vmul.f32 %v330, 0.2
      %v361 = vmul.f32 %v332, 0.2
      %v362 = vmul.f32 %v336, 0.2
      %v363 = vmul.f32 %v338, 0.2
      %v364 = vmul.f32 %v342, 0.2
      %v365 = vmul.f32 %v344, 0.2
      %v366 = vmul.f32 %v348, 0.2
      %v367 = vmul.f32 %v350, 0.2
      %v368 = vsel %vm352, %v330, %v360
      %v369 = vsel %vm353, %v332, %v361
      %v370 = vsel %vm354, %v336, %v362
      %v371 = vsel %vm355, %v338, %v363
      %v372 = vsel %vm356, %v342, %v364
      %v373 = vsel %vm357, %v344, %v365
      %v374 = vsel %vm358, %v348, %v366
      %v375 = vsel %vm359, %v350, %v367
      %376 = vst [vmem:[%s215] sm:$0xff] %v368
      %377 = vst [vmem:[%s215 + $0x8] sm:$0xff] %v369
      %378 = vst [vmem:[%s215 + $0x10] sm:$0xff] %v370
      %379 = vst [vmem:[%s215 + $0x18] sm:$0xff] %v371
      %380 = vst [vmem:[%s215 + $0x20] sm:$0xff] %v372
      %381 = vst [vmem:[%s215 + $0x28] sm:$0xff] %v373
      %382 = vst [vmem:[%s215 + $0x30] sm:$0xff] %v374
      %383 = vst [vmem:[%s215 + $0x38] sm:$0xff] %v375
      %s384 = smul.u32 4, %s18
      %s385 = smul.u32 2, %s19
      %p386 = scmp.lt.s32.totalorder %s384, 7
      %s387 = scalar_select %p386, %s384, 7
      %p388 = scmp.lt.s32.totalorder %s385, 1
      %s389 = scalar_select %p388, %s385, 1
      %s390 = smul.addr %s387, 2
      %s391 = sadd.s32 %s389, %s390
      %s392 = smul.addr %s391, 8
      %s393 = scalar_lea.vmem %s3, %s392
      // Predicated region
      $region33: #{_lambda_.1} parent=31 // pred_check
        %p394 = pneg %p116
      $region34: #{_lambda_.1} parent=31 // pred_check_branch
        %396 = sbr.rel (%p394) target = $region36
      $region35: #{_lambda_.1} parent=31 // pred_region
        %s397 = smul.u32 4, %s18
        %s398 = smul.u32 2, %s19
      $region36: #{_lambda_.1} parent=31 // pred_fallthru
        _
    $region32: #{_lambda_.1} parent=5 // pred_fallthru
      _
    %p399 = scmp.le.s32.totalorder 2, %s9
    // Predicated region
    $region37: #{_lambda_.1} parent=5 // pred_check
      %p400 = pneg %p399
    $region38: #{_lambda_.1} parent=5 // pred_check_branch
      %402 = sbr.rel (%p400) target = $region40
    $region39: #{_lambda_.1} parent=5 // pred_region
      %s403 = ssub.s32 %s9, 2
      // Predicated region
      $region41: #{_lambda_.1} parent=39 // pred_check
        %p404 = pneg %p122
      $region42: #{_lambda_.1} parent=39 // pred_check_branch
        %406 = sbr.rel (%p404) target = $region44
      $region43: #{_lambda_.1} parent=39 // pred_region
        %s407 = smul.u32 4, %s20
        %s408 = smul.u32 2, %s21
        %p409 = scmp.lt.s32.totalorder %s407, 7
        %s410 = scalar_select %p409, %s407, 7
        %p411 = scmp.lt.s32.totalorder %s408, 1
        %s412 = scalar_select %p411, %s408, 1
        %s413 = smul.addr %s410, 2
        %s414 = sadd.s32 %s412, %s413
        %s415 = smul.addr %s414, 8
        %s416 = scalar_lea.vmem %s3, %s415
      $region44: #{_lambda_.1} parent=39 // pred_fallthru
        _
    $region40: #{_lambda_.1} parent=5 // pred_fallthru
      _
  $region6: #{_lambda_.1} parent=0 // loop_footer
    %s13 = sadd.s32 1, %s9
  $region7: #{_lambda_.1} parent=0 // loop_footer_branch
    %8 = sbr.rel target = $region3
  $region8: #{_lambda_.1} parent=0 // loop_exit
    _

</llo_original>
